<compile_context>
chip_gen: v5e
topology: v5e:2x2
jax: 0.10.0
libtpu: 0.0.40
codegen_flags: <defaults>
</compile_context>

<pallas_src>
import functools

import jax
import jax.numpy as jnp
from jax import lax
from jax.experimental import pallas as pl
from jax.experimental.pallas import tpu as pltpu


def _dw_block_kernel(x_ref, w1_ref, maskw_ref, w3_ref, pv_ref, b3_ref, out_ref,
                     *, HW, W, KH, KW, PAD, NT, CIN):
    w1 = w1_ref[...]                            # (G, CIN)   s1 pre-folded
    w3 = w3_ref[...]                            # (OUTC, G)  s3 pre-folded
    b1 = pv_ref[0]                              # (G, 1)
    a1 = pv_ref[1]
    b2 = pv_ref[2]
    a2 = pv_ref[3]
    b3 = b3_ref[...]                            # (OUTC, 1)

    for n in range(NT):                         # static unroll over images
        x = x_ref[n]                            # (CIN, HW) spatial-in-lanes

        # -------- stage 1: 1x1 conv (+folded BN) + bias + PReLU ------------
        if CIN <= 8:
            # CIN broadcast mul-adds on the VPU; an f32 MXU pass at K=CIN<=8
            # would use <4% of the array and expose its push/pop latency.
            y1 = w1[:, 0:1] * x[0:1, :]
            for c in range(1, CIN):
                y1 = y1 + w1[:, c:c + 1] * x[c:c + 1, :]
        else:
            y1 = jnp.dot(w1, x, preferred_element_type=jnp.float32)
        y1 = y1 + b1
        y1 = jnp.where(y1 > 0, y1, a1 * y1)     # per-channel PReLU

        # -------- stage 2: KxK depthwise "same" conv (+folded BN) + PReLU --
        # lane rolls (XLU) per tap; maskw already holds edge_mask * s2 * tap.
        acc = jnp.zeros(y1.shape, jnp.float32)
        for dh in range(KH):                    # static unrolled taps
            oh = dh - PAD
            for dw in range(KW):
                ow = dw - PAD
                s = oh * W + ow                 # flat input offset
                shifted = y1 if s == 0 else pltpu.roll(y1, (-s) % HW, 1)
                acc = acc + shifted * maskw_ref[dh * KW + dw]
        y2 = acc + b2
        y2 = jnp.where(y2 > 0, y2, a2 * y2)

        # -------- stage 3: 1x1 conv (+folded BN) + bias --------------------
        y3 = jnp.dot(w3, y2, preferred_element_type=jnp.float32) + b3
        out_ref[n] = y3.astype(out_ref.dtype)   # lane-dense (OUTC, HW) store


def depthwise_block(x_nchw, params, *, kernel=(3, 3), stride=1, padding=1,
                    batch_tiles=1):
    """x_nchw: (N, in_c, H, W) float32. Returns (N, out_c, H, W).

    batch_tiles=1 collapses the batch into a single grid step (best on
    single-TC v5e/v6e); on v7x pass batch_tiles=2 to shard the 'parallel'
    grid axis across both TensorCores.
    """
    (w1, s1, b1, a1, wdw, s2, b2, a2, w3, s3, b3) = params
    N, CIN, H, W = x_nchw.shape
    G = w1.shape[1]
    OUTC = w3.shape[1]
    KH, KW = kernel
    # This kernel implements the "same"-shaped depthwise stage used by
    # MobileFaceNet blocks (stride 1, symmetric padding (K-1)/2).
    # TODO(synk): add strided / valid-padding variants (lane-deinterleaved
    # output subsample) if those configs are ever needed.
    assert stride == 1 and KH == KW and 2 * padding == KH - 1, \
        "kernel supports stride=1 with 'same' padding only"
    assert N % batch_tiles == 0, "batch_tiles must divide the batch"
    NT = N // batch_tiles
    HW = H * W
    f32 = jnp.float32

    # ---- fold BN scales into weights; pack per-channel bias/alpha vectors --
    w1s = (jnp.transpose(w1) * s1[:, None]).astype(f32)           # (G, CIN)
    w3s = (jnp.transpose(w3) * s3[:, None]).astype(f32)           # (OUTC, G)
    pvec = jnp.stack([b1, a1, b2, a2]).astype(f32).reshape(4, G, 1)
    b3c = b3.astype(f32).reshape(OUTC, 1)

    # per-tap edge-mask x (BN-folded) depthwise tap -> (KH*KW, G, HW)
    rows = jnp.arange(HW, dtype=jnp.int32) // W
    cols = jnp.arange(HW, dtype=jnp.int32) % W
    masks = []
    for dh in range(KH):
        oh = dh - padding
        for dw in range(KW):
            ow = dw - padding
            m = ((rows + oh >= 0) & (rows + oh < H) &
                 (cols + ow >= 0) & (cols + ow < W))
            masks.append(m.astype(f32))
    masks = jnp.stack(masks)                                      # (KH*KW, HW)
    wdw_s = (wdw.astype(f32) * s2.astype(f32)).reshape(KH * KW, G)
    maskw = wdw_s[:, :, None] * masks[:, None, :]                 # (KH*KW,G,HW)

    x_flat = x_nchw.reshape(N, CIN, HW).astype(f32)               # spatial lanes
    args = (x_flat, w1s, maskw, w3s, pvec, b3c)

    def const_spec(a):
        nd = a.ndim
        return pl.BlockSpec(a.shape, lambda t, _nd=nd: (0,) * _nd)

    in_specs = [pl.BlockSpec((NT, CIN, HW), lambda t: (t, 0, 0))] + \
               [const_spec(a) for a in args[1:]]

    kern = functools.partial(_dw_block_kernel, HW=HW, W=W, KH=KH, KW=KW,
                             PAD=padding, NT=NT, CIN=CIN)

    flops = 2 * (G * CIN + G * KH * KW + OUTC * G) * N * HW
    bytes_accessed = 4 * (x_flat.size + N * OUTC * HW + w1s.size
                          + maskw.size + w3s.size + pvec.size + b3c.size)

    out_flat = pl.pallas_call(
        kern,
        out_shape=jax.ShapeDtypeStruct((N, OUTC, HW), f32),
        grid_spec=pltpu.PrefetchScalarGridSpec(
            num_scalar_prefetch=0,
            grid=(batch_tiles,),
            in_specs=in_specs,
            out_specs=pl.BlockSpec((NT, OUTC, HW), lambda t: (t, 0, 0)),
        ),
        compiler_params=pltpu.CompilerParams(
            dimension_semantics=("parallel",)),
        cost_estimate=pl.CostEstimate(flops=flops, transcendentals=0,
                                      bytes_accessed=bytes_accessed),
    )(*args)

    # (N, OUTC, HW) is already NCHW modulo a reshape.
    return out_flat.reshape(N, OUTC, H, W)


def _make_params(key, in_c, out_c, groups, kernel):
    """Deterministic synthetic params; BN folded to (scale, bias)."""
    KH, KW = kernel
    ks = jax.random.split(key, 12)

    def bn_fold(k, c):
        k1, k2, k3, k4 = jax.random.split(k, 4)
        gamma = 1.0 + 0.1 * jax.random.normal(k1, (c,))
        beta = 0.1 * jax.random.normal(k2, (c,))
        mean = 0.1 * jax.random.normal(k3, (c,))
        var = jnp.abs(jax.random.normal(k4, (c,))) + 0.5
        scale = gamma / jnp.sqrt(var + 1e-5)
        bias = beta - mean * scale
        return scale, bias

    w1 = 0.2 * jax.random.normal(ks[0], (in_c, groups))           # 1x1: (CIN, G)
    s1, b1 = bn_fold(ks[1], groups)
    a1 = 0.25 + 0.05 * jax.random.normal(ks[2], (groups,))        # PReLU slopes

    wdw = 0.2 * jax.random.normal(ks[3], (KH, KW, groups))        # depthwise taps
    s2, b2 = bn_fold(ks[4], groups)
    a2 = 0.25 + 0.05 * jax.random.normal(ks[5], (groups,))

    w3 = 0.2 * jax.random.normal(ks[6], (groups, out_c))          # 1x1: (G, OUTC)
    s3, b3 = bn_fold(ks[7], out_c)

    return (w1, s1, b1, a1, wdw, s2, b2, a2, w3, s3, b3)


def _reference(x_nchw, params, *, kernel, stride, padding):
    """Pure-JAX (XLA) reference of the same forward, for verification."""
    (w1, s1, b1, a1, wdw, s2, b2, a2, w3, s3, b3) = params
    KH, KW = kernel
    G = w1.shape[1]
    x = jnp.transpose(x_nchw, (0, 2, 3, 1))                        # NHWC

    y = jnp.einsum('nhwc,cg->nhwg', x, w1)
    y = y * s1 + b1
    y = jnp.where(y > 0, y, a1 * y)

    wdw_hwio = wdw.reshape(KH, KW, 1, G)
    y = lax.conv_general_dilated(
        y, wdw_hwio, window_strides=(stride, stride),
        padding=[(padding, padding), (padding, padding)],
        dimension_numbers=('NHWC', 'HWIO', 'NHWC'),
        feature_group_count=G)
    y = y * s2 + b2
    y = jnp.where(y > 0, y, a2 * y)

    y = jnp.einsum('nhwg,go->nhwo', y, w3)
    y = y * s3 + b3
    return jnp.transpose(y, (0, 3, 1, 2))                          # NCHW


if __name__ == "__main__":
    key = jax.random.PRNGKey(0)
    k_x, k_p = jax.random.split(key)

    # DepthWise_Block(in_c=4, out_c=8, kernel=(3,3), stride=1, padding=1, groups=8)
    N, IN_C, H, W = 2, 4, 16, 16
    OUT_C, GROUPS = 8, 8
    KERNEL, STRIDE, PADDING = (3, 3), 1, 1

    x = jax.random.normal(k_x, (N, IN_C, H, W), dtype=jnp.float32)  # NCHW input
    params = _make_params(k_p, IN_C, OUT_C, GROUPS, KERNEL)

    out = depthwise_block(x, params, kernel=KERNEL, stride=STRIDE,
                          padding=PADDING)                          # batch_tiles=1
    out = jax.block_until_ready(out)

    ref = _reference(x, params, kernel=KERNEL, stride=STRIDE, padding=PADDING)
    assert out.shape == (N, OUT_C, H, W), out.shape
    assert jnp.allclose(out, ref, atol=1e-4, rtol=1e-4), \
        float(jnp.max(jnp.abs(out - ref)))

    print("KERNEL_OK")
</pallas_src>

<mosaic_0001>
module attributes {stable_mosaic.version = 11 : i64} {
  func.func @_dw_block_kernel(%arg0: i32, %arg1: memref<2x4x256xf32, #tpu.memory_space<vmem>>, %arg2: memref<8x4xf32, #tpu.memory_space<vmem>>, %arg3: memref<9x8x256xf32, #tpu.memory_space<vmem>>, %arg4: memref<8x8xf32, #tpu.memory_space<vmem>>, %arg5: memref<4x8x1xf32, #tpu.memory_space<vmem>>, %arg6: memref<8x1xf32, #tpu.memory_space<vmem>>, %arg7: memref<2x8x256xf32, #tpu.memory_space<vmem>>) attributes {dimension_semantics = [#tpu.dimension_semantics<parallel>], iteration_bounds = array<i64: 1>, scalar_prefetch = 0 : i64, scratch_operands = 0 : i64, tpu.core_type = #tpu.core_type<tc>, window_params = [{transform_indices = @transform_0, window_bounds = array<i64: 2, 4, 256>}, {pipeline_mode = #tpu.pipeline_mode<synchronous>, transform_indices = @transform_1, window_bounds = array<i64: 8, 4>}, {pipeline_mode = #tpu.pipeline_mode<synchronous>, transform_indices = @transform_2, window_bounds = array<i64: 9, 8, 256>}, {pipeline_mode = #tpu.pipeline_mode<synchronous>, transform_indices = @transform_3, window_bounds = array<i64: 8, 8>}, {pipeline_mode = #tpu.pipeline_mode<synchronous>, transform_indices = @transform_4, window_bounds = array<i64: 4, 8, 1>}, {pipeline_mode = #tpu.pipeline_mode<synchronous>, transform_indices = @transform_5, window_bounds = array<i64: 8, 1>}, {transform_indices = @transform_6, window_bounds = array<i64: 2, 8, 256>}]} {
    %c0 = arith.constant 0 : index
    %c0_0 = arith.constant 0 : index
    %0 = vector.load %arg2[%c0, %c0_0] : memref<8x4xf32, #tpu.memory_space<vmem>>, vector<8x4xf32>
    %c0_1 = arith.constant 0 : index
    %c0_2 = arith.constant 0 : index
    %1 = vector.load %arg4[%c0_1, %c0_2] : memref<8x8xf32, #tpu.memory_space<vmem>>, vector<8x8xf32>
    %c0_3 = arith.constant 0 : index
    %c0_4 = arith.constant 0 : index
    %c0_5 = arith.constant 0 : index
    %2 = vector.load %arg5[%c0_3, %c0_4, %c0_5] : memref<4x8x1xf32, #tpu.memory_space<vmem>>, vector<1x8x1xf32>
    %3 = vector.shape_cast %2 : vector<1x8x1xf32> to vector<8x1xf32>
    %c1 = arith.constant 1 : index
    %c0_6 = arith.constant 0 : index
    %c0_7 = arith.constant 0 : index
    %4 = vector.load %arg5[%c1, %c0_6, %c0_7] : memref<4x8x1xf32, #tpu.memory_space<vmem>>, vector<1x8x1xf32>
    %5 = vector.shape_cast %4 : vector<1x8x1xf32> to vector<8x1xf32>
    %c2 = arith.constant 2 : index
    %c0_8 = arith.constant 0 : index
    %c0_9 = arith.constant 0 : index
    %6 = vector.load %arg5[%c2, %c0_8, %c0_9] : memref<4x8x1xf32, #tpu.memory_space<vmem>>, vector<1x8x1xf32>
    %7 = vector.shape_cast %6 : vector<1x8x1xf32> to vector<8x1xf32>
    %c3 = arith.constant 3 : index
    %c0_10 = arith.constant 0 : index
    %c0_11 = arith.constant 0 : index
    %8 = vector.load %arg5[%c3, %c0_10, %c0_11] : memref<4x8x1xf32, #tpu.memory_space<vmem>>, vector<1x8x1xf32>
    %9 = vector.shape_cast %8 : vector<1x8x1xf32> to vector<8x1xf32>
    %c0_12 = arith.constant 0 : index
    %c0_13 = arith.constant 0 : index
    %10 = vector.load %arg6[%c0_12, %c0_13] : memref<8x1xf32, #tpu.memory_space<vmem>>, vector<8x1xf32>
    %c0_14 = arith.constant 0 : index
    %c0_15 = arith.constant 0 : index
    %c0_16 = arith.constant 0 : index
    %11 = vector.load %arg1[%c0_14, %c0_15, %c0_16] : memref<2x4x256xf32, #tpu.memory_space<vmem>>, vector<1x4x256xf32>
    %12 = vector.shape_cast %11 : vector<1x4x256xf32> to vector<4x256xf32>
    %13 = vector.extract_strided_slice %0 {offsets = [0, 0], sizes = [8, 1], strides = [1, 1]} : vector<8x4xf32> to vector<8x1xf32>
    %14 = vector.extract_strided_slice %12 {offsets = [0, 0], sizes = [1, 256], strides = [1, 1]} : vector<4x256xf32> to vector<1x256xf32>
    %15 = vector.broadcast %13 : vector<8x1xf32> to vector<8x256xf32>
    %16 = vector.broadcast %14 : vector<1x256xf32> to vector<8x256xf32>
    %17 = arith.mulf %15, %16 : vector<8x256xf32>
    %18 = vector.extract_strided_slice %0 {offsets = [0, 1], sizes = [8, 1], strides = [1, 1]} : vector<8x4xf32> to vector<8x1xf32>
    %19 = vector.extract_strided_slice %12 {offsets = [1, 0], sizes = [1, 256], strides = [1, 1]} : vector<4x256xf32> to vector<1x256xf32>
    %20 = vector.broadcast %18 : vector<8x1xf32> to vector<8x256xf32>
    %21 = vector.broadcast %19 : vector<1x256xf32> to vector<8x256xf32>
    %22 = arith.mulf %20, %21 : vector<8x256xf32>
    %23 = arith.addf %17, %22 : vector<8x256xf32>
    %24 = vector.extract_strided_slice %0 {offsets = [0, 2], sizes = [8, 1], strides = [1, 1]} : vector<8x4xf32> to vector<8x1xf32>
    %25 = vector.extract_strided_slice %12 {offsets = [2, 0], sizes = [1, 256], strides = [1, 1]} : vector<4x256xf32> to vector<1x256xf32>
    %26 = vector.broadcast %24 : vector<8x1xf32> to vector<8x256xf32>
    %27 = vector.broadcast %25 : vector<1x256xf32> to vector<8x256xf32>
    %28 = arith.mulf %26, %27 : vector<8x256xf32>
    %29 = arith.addf %23, %28 : vector<8x256xf32>
    %30 = vector.extract_strided_slice %0 {offsets = [0, 3], sizes = [8, 1], strides = [1, 1]} : vector<8x4xf32> to vector<8x1xf32>
    %31 = vector.extract_strided_slice %12 {offsets = [3, 0], sizes = [1, 256], strides = [1, 1]} : vector<4x256xf32> to vector<1x256xf32>
    %32 = vector.broadcast %30 : vector<8x1xf32> to vector<8x256xf32>
    %33 = vector.broadcast %31 : vector<1x256xf32> to vector<8x256xf32>
    %34 = arith.mulf %32, %33 : vector<8x256xf32>
    %35 = arith.addf %29, %34 : vector<8x256xf32>
    %36 = vector.broadcast %3 : vector<8x1xf32> to vector<8x256xf32>
    %37 = arith.addf %35, %36 : vector<8x256xf32>
    %cst = arith.constant 0.000000e+00 : f32
    %38 = vector.broadcast %cst : f32 to vector<8x256xf32>
    %39 = arith.cmpf ogt, %37, %38 : vector<8x256xf32>
    %40 = vector.broadcast %5 : vector<8x1xf32> to vector<8x256xf32>
    %41 = arith.mulf %40, %37 : vector<8x256xf32>
    %42 = arith.select %39, %37, %41 : vector<8x256xi1>, vector<8x256xf32>
    %cst_17 = arith.constant 0.000000e+00 : f32
    %43 = vector.broadcast %cst_17 : f32 to vector<8x256xf32>
    %c17_i32 = arith.constant 17 : i32
    %44 = tpu.dynamic_rotate %42 by %c17_i32 dim 1 : vector<8x256xf32>, i32 -> vector<8x256xf32>
    %c0_18 = arith.constant 0 : index
    %c0_19 = arith.constant 0 : index
    %c0_20 = arith.constant 0 : index
    %45 = vector.load %arg3[%c0_18, %c0_19, %c0_20] : memref<9x8x256xf32, #tpu.memory_space<vmem>>, vector<1x8x256xf32>
    %46 = vector.shape_cast %45 : vector<1x8x256xf32> to vector<8x256xf32>
    %47 = arith.mulf %44, %46 : vector<8x256xf32>
    %48 = arith.addf %43, %47 : vector<8x256xf32>
    %c16_i32 = arith.constant 16 : i32
    %49 = tpu.dynamic_rotate %42 by %c16_i32 dim 1 : vector<8x256xf32>, i32 -> vector<8x256xf32>
    %c1_21 = arith.constant 1 : index
    %c0_22 = arith.constant 0 : index
    %c0_23 = arith.constant 0 : index
    %50 = vector.load %arg3[%c1_21, %c0_22, %c0_23] : memref<9x8x256xf32, #tpu.memory_space<vmem>>, vector<1x8x256xf32>
    %51 = vector.shape_cast %50 : vector<1x8x256xf32> to vector<8x256xf32>
    %52 = arith.mulf %49, %51 : vector<8x256xf32>
    %53 = arith.addf %48, %52 : vector<8x256xf32>
    %c15_i32 = arith.constant 15 : i32
    %54 = tpu.dynamic_rotate %42 by %c15_i32 dim 1 : vector<8x256xf32>, i32 -> vector<8x256xf32>
    %c2_24 = arith.constant 2 : index
    %c0_25 = arith.constant 0 : index
    %c0_26 = arith.constant 0 : index
    %55 = vector.load %arg3[%c2_24, %c0_25, %c0_26] : memref<9x8x256xf32, #tpu.memory_space<vmem>>, vector<1x8x256xf32>
    %56 = vector.shape_cast %55 : vector<1x8x256xf32> to vector<8x256xf32>
    %57 = arith.mulf %54, %56 : vector<8x256xf32>
    %58 = arith.addf %53, %57 : vector<8x256xf32>
    %c1_i32 = arith.constant 1 : i32
    %59 = tpu.dynamic_rotate %42 by %c1_i32 dim 1 : vector<8x256xf32>, i32 -> vector<8x256xf32>
    %c3_27 = arith.constant 3 : index
    %c0_28 = arith.constant 0 : index
    %c0_29 = arith.constant 0 : index
    %60 = vector.load %arg3[%c3_27, %c0_28, %c0_29] : memref<9x8x256xf32, #tpu.memory_space<vmem>>, vector<1x8x256xf32>
    %61 = vector.shape_cast %60 : vector<1x8x256xf32> to vector<8x256xf32>
    %62 = arith.mulf %59, %61 : vector<8x256xf32>
    %63 = arith.addf %58, %62 : vector<8x256xf32>
    %c4 = arith.constant 4 : index
    %c0_30 = arith.constant 0 : index
    %c0_31 = arith.constant 0 : index
    %64 = vector.load %arg3[%c4, %c0_30, %c0_31] : memref<9x8x256xf32, #tpu.memory_space<vmem>>, vector<1x8x256xf32>
    %65 = vector.shape_cast %64 : vector<1x8x256xf32> to vector<8x256xf32>
    %66 = arith.mulf %42, %65 : vector<8x256xf32>
    %67 = arith.addf %63, %66 : vector<8x256xf32>
    %c255_i32 = arith.constant 255 : i32
    %68 = tpu.dynamic_rotate %42 by %c255_i32 dim 1 : vector<8x256xf32>, i32 -> vector<8x256xf32>
    %c5 = arith.constant 5 : index
    %c0_32 = arith.constant 0 : index
    %c0_33 = arith.constant 0 : index
    %69 = vector.load %arg3[%c5, %c0_32, %c0_33] : memref<9x8x256xf32, #tpu.memory_space<vmem>>, vector<1x8x256xf32>
    %70 = vector.shape_cast %69 : vector<1x8x256xf32> to vector<8x256xf32>
    %71 = arith.mulf %68, %70 : vector<8x256xf32>
    %72 = arith.addf %67, %71 : vector<8x256xf32>
    %c241_i32 = arith.constant 241 : i32
    %73 = tpu.dynamic_rotate %42 by %c241_i32 dim 1 : vector<8x256xf32>, i32 -> vector<8x256xf32>
    %c6 = arith.constant 6 : index
    %c0_34 = arith.constant 0 : index
    %c0_35 = arith.constant 0 : index
    %74 = vector.load %arg3[%c6, %c0_34, %c0_35] : memref<9x8x256xf32, #tpu.memory_space<vmem>>, vector<1x8x256xf32>
    %75 = vector.shape_cast %74 : vector<1x8x256xf32> to vector<8x256xf32>
    %76 = arith.mulf %73, %75 : vector<8x256xf32>
    %77 = arith.addf %72, %76 : vector<8x256xf32>
    %c240_i32 = arith.constant 240 : i32
    %78 = tpu.dynamic_rotate %42 by %c240_i32 dim 1 : vector<8x256xf32>, i32 -> vector<8x256xf32>
    %c7 = arith.constant 7 : index
    %c0_36 = arith.constant 0 : index
    %c0_37 = arith.constant 0 : index
    %79 = vector.load %arg3[%c7, %c0_36, %c0_37] : memref<9x8x256xf32, #tpu.memory_space<vmem>>, vector<1x8x256xf32>
    %80 = vector.shape_cast %79 : vector<1x8x256xf32> to vector<8x256xf32>
    %81 = arith.mulf %78, %80 : vector<8x256xf32>
    %82 = arith.addf %77, %81 : vector<8x256xf32>
    %c239_i32 = arith.constant 239 : i32
    %83 = tpu.dynamic_rotate %42 by %c239_i32 dim 1 : vector<8x256xf32>, i32 -> vector<8x256xf32>
    %c8 = arith.constant 8 : index
    %c0_38 = arith.constant 0 : index
    %c0_39 = arith.constant 0 : index
    %84 = vector.load %arg3[%c8, %c0_38, %c0_39] : memref<9x8x256xf32, #tpu.memory_space<vmem>>, vector<1x8x256xf32>
    %85 = vector.shape_cast %84 : vector<1x8x256xf32> to vector<8x256xf32>
    %86 = arith.mulf %83, %85 : vector<8x256xf32>
    %87 = arith.addf %82, %86 : vector<8x256xf32>
    %88 = vector.broadcast %7 : vector<8x1xf32> to vector<8x256xf32>
    %89 = arith.addf %87, %88 : vector<8x256xf32>
    %cst_40 = arith.constant 0.000000e+00 : f32
    %90 = vector.broadcast %cst_40 : f32 to vector<8x256xf32>
    %91 = arith.cmpf ogt, %89, %90 : vector<8x256xf32>
    %92 = vector.broadcast %9 : vector<8x1xf32> to vector<8x256xf32>
    %93 = arith.mulf %92, %89 : vector<8x256xf32>
    %94 = arith.select %91, %89, %93 : vector<8x256xi1>, vector<8x256xf32>
    %cst_41 = arith.constant dense<0.000000e+00> : vector<8x256xf32>
    %95 = tpu.matmul %1, %94, %cst_41 {dimension_numbers = #tpu.dot_dimension_numbers<[1], [0], [0], [1], [0, 0, 1, 1], [], []>} : vector<8x8xf32>, vector<8x256xf32>, vector<8x256xf32> -> vector<8x256xf32>
    %96 = vector.broadcast %10 : vector<8x1xf32> to vector<8x256xf32>
    %97 = arith.addf %95, %96 : vector<8x256xf32>
    %c0_42 = arith.constant 0 : index
    %c0_43 = arith.constant 0 : index
    %c0_44 = arith.constant 0 : index
    %98 = vector.load %arg7[%c0_42, %c0_43, %c0_44] : memref<2x8x256xf32, #tpu.memory_space<vmem>>, vector<1x8x256xf32>
    %99 = vector.shape_cast %98 : vector<1x8x256xf32> to vector<8x256xf32>
    %100 = vector.shape_cast %97 : vector<8x256xf32> to vector<1x8x256xf32>
    tpu.vector_store %arg7[%c0_42, %c0_43, %c0_44], %100 {strides = array<i32>} : memref<2x8x256xf32, #tpu.memory_space<vmem>>, vector<1x8x256xf32>,
    %c1_45 = arith.constant 1 : index
    %c0_46 = arith.constant 0 : index
    %c0_47 = arith.constant 0 : index
    %101 = vector.load %arg1[%c1_45, %c0_46, %c0_47] : memref<2x4x256xf32, #tpu.memory_space<vmem>>, vector<1x4x256xf32>
    %102 = vector.shape_cast %101 : vector<1x4x256xf32> to vector<4x256xf32>
    %103 = vector.extract_strided_slice %0 {offsets = [0, 0], sizes = [8, 1], strides = [1, 1]} : vector<8x4xf32> to vector<8x1xf32>
    %104 = vector.extract_strided_slice %102 {offsets = [0, 0], sizes = [1, 256], strides = [1, 1]} : vector<4x256xf32> to vector<1x256xf32>
    %105 = vector.broadcast %103 : vector<8x1xf32> to vector<8x256xf32>
    %106 = vector.broadcast %104 : vector<1x256xf32> to vector<8x256xf32>
    %107 = arith.mulf %105, %106 : vector<8x256xf32>
    %108 = vector.extract_strided_slice %0 {offsets = [0, 1], sizes = [8, 1], strides = [1, 1]} : vector<8x4xf32> to vector<8x1xf32>
    %109 = vector.extract_strided_slice %102 {offsets = [1, 0], sizes = [1, 256], strides = [1, 1]} : vector<4x256xf32> to vector<1x256xf32>
    %110 = vector.broadcast %108 : vector<8x1xf32> to vector<8x256xf32>
    %111 = vector.broadcast %109 : vector<1x256xf32> to vector<8x256xf32>
    %112 = arith.mulf %110, %111 : vector<8x256xf32>
    %113 = arith.addf %107, %112 : vector<8x256xf32>
    %114 = vector.extract_strided_slice %0 {offsets = [0, 2], sizes = [8, 1], strides = [1, 1]} : vector<8x4xf32> to vector<8x1xf32>
    %115 = vector.extract_strided_slice %102 {offsets = [2, 0], sizes = [1, 256], strides = [1, 1]} : vector<4x256xf32> to vector<1x256xf32>
    %116 = vector.broadcast %114 : vector<8x1xf32> to vector<8x256xf32>
    %117 = vector.broadcast %115 : vector<1x256xf32> to vector<8x256xf32>
    %118 = arith.mulf %116, %117 : vector<8x256xf32>
    %119 = arith.addf %113, %118 : vector<8x256xf32>
    %120 = vector.extract_strided_slice %0 {offsets = [0, 3], sizes = [8, 1], strides = [1, 1]} : vector<8x4xf32> to vector<8x1xf32>
    %121 = vector.extract_strided_slice %102 {offsets = [3, 0], sizes = [1, 256], strides = [1, 1]} : vector<4x256xf32> to vector<1x256xf32>
    %122 = vector.broadcast %120 : vector<8x1xf32> to vector<8x256xf32>
    %123 = vector.broadcast %121 : vector<1x256xf32> to vector<8x256xf32>
    %124 = arith.mulf %122, %123 : vector<8x256xf32>
    %125 = arith.addf %119, %124 : vector<8x256xf32>
    %126 = vector.broadcast %3 : vector<8x1xf32> to vector<8x256xf32>
    %127 = arith.addf %125, %126 : vector<8x256xf32>
    %cst_48 = arith.constant 0.000000e+00 : f32
    %128 = vector.broadcast %cst_48 : f32 to vector<8x256xf32>
    %129 = arith.cmpf ogt, %127, %128 : vector<8x256xf32>
    %130 = vector.broadcast %5 : vector<8x1xf32> to vector<8x256xf32>
    %131 = arith.mulf %130, %127 : vector<8x256xf32>
    %132 = arith.select %129, %127, %131 : vector<8x256xi1>, vector<8x256xf32>
    %cst_49 = arith.constant 0.000000e+00 : f32
    %133 = vector.broadcast %cst_49 : f32 to vector<8x256xf32>
    %c17_i32_50 = arith.constant 17 : i32
    %134 = tpu.dynamic_rotate %132 by %c17_i32_50 dim 1 : vector<8x256xf32>, i32 -> vector<8x256xf32>
    %c0_51 = arith.constant 0 : index
    %c0_52 = arith.constant 0 : index
    %c0_53 = arith.constant 0 : index
    %135 = vector.load %arg3[%c0_51, %c0_52, %c0_53] : memref<9x8x256xf32, #tpu.memory_space<vmem>>, vector<1x8x256xf32>
    %136 = vector.shape_cast %135 : vector<1x8x256xf32> to vector<8x256xf32>
    %137 = arith.mulf %134, %136 : vector<8x256xf32>
    %138 = arith.addf %133, %137 : vector<8x256xf32>
    %c16_i32_54 = arith.constant 16 : i32
    %139 = tpu.dynamic_rotate %132 by %c16_i32_54 dim 1 : vector<8x256xf32>, i32 -> vector<8x256xf32>
    %c1_55 = arith.constant 1 : index
    %c0_56 = arith.constant 0 : index
    %c0_57 = arith.constant 0 : index
    %140 = vector.load %arg3[%c1_55, %c0_56, %c0_57] : memref<9x8x256xf32, #tpu.memory_space<vmem>>, vector<1x8x256xf32>
    %141 = vector.shape_cast %140 : vector<1x8x256xf32> to vector<8x256xf32>
    %142 = arith.mulf %139, %141 : vector<8x256xf32>
    %143 = arith.addf %138, %142 : vector<8x256xf32>
    %c15_i32_58 = arith.constant 15 : i32
    %144 = tpu.dynamic_rotate %132 by %c15_i32_58 dim 1 : vector<8x256xf32>, i32 -> vector<8x256xf32>
    %c2_59 = arith.constant 2 : index
    %c0_60 = arith.constant 0 : index
    %c0_61 = arith.constant 0 : index
    %145 = vector.load %arg3[%c2_59, %c0_60, %c0_61] : memref<9x8x256xf32, #tpu.memory_space<vmem>>, vector<1x8x256xf32>
    %146 = vector.shape_cast %145 : vector<1x8x256xf32> to vector<8x256xf32>
    %147 = arith.mulf %144, %146 : vector<8x256xf32>
    %148 = arith.addf %143, %147 : vector<8x256xf32>
    %c1_i32_62 = arith.constant 1 : i32
    %149 = tpu.dynamic_rotate %132 by %c1_i32_62 dim 1 : vector<8x256xf32>, i32 -> vector<8x256xf32>
    %c3_63 = arith.constant 3 : index
    %c0_64 = arith.constant 0 : index
    %c0_65 = arith.constant 0 : index
    %150 = vector.load %arg3[%c3_63, %c0_64, %c0_65] : memref<9x8x256xf32, #tpu.memory_space<vmem>>, vector<1x8x256xf32>
    %151 = vector.shape_cast %150 : vector<1x8x256xf32> to vector<8x256xf32>
    %152 = arith.mulf %149, %151 : vector<8x256xf32>
    %153 = arith.addf %148, %152 : vector<8x256xf32>
    %c4_66 = arith.constant 4 : index
    %c0_67 = arith.constant 0 : index
    %c0_68 = arith.constant 0 : index
    %154 = vector.load %arg3[%c4_66, %c0_67, %c0_68] : memref<9x8x256xf32, #tpu.memory_space<vmem>>, vector<1x8x256xf32>
    %155 = vector.shape_cast %154 : vector<1x8x256xf32> to vector<8x256xf32>
    %156 = arith.mulf %132, %155 : vector<8x256xf32>
    %157 = arith.addf %153, %156 : vector<8x256xf32>
    %c255_i32_69 = arith.constant 255 : i32
    %158 = tpu.dynamic_rotate %132 by %c255_i32_69 dim 1 : vector<8x256xf32>, i32 -> vector<8x256xf32>
    %c5_70 = arith.constant 5 : index
    %c0_71 = arith.constant 0 : index
    %c0_72 = arith.constant 0 : index
    %159 = vector.load %arg3[%c5_70, %c0_71, %c0_72] : memref<9x8x256xf32, #tpu.memory_space<vmem>>, vector<1x8x256xf32>
    %160 = vector.shape_cast %159 : vector<1x8x256xf32> to vector<8x256xf32>
    %161 = arith.mulf %158, %160 : vector<8x256xf32>
    %162 = arith.addf %157, %161 : vector<8x256xf32>
    %c241_i32_73 = arith.constant 241 : i32
    %163 = tpu.dynamic_rotate %132 by %c241_i32_73 dim 1 : vector<8x256xf32>, i32 -> vector<8x256xf32>
    %c6_74 = arith.constant 6 : index
    %c0_75 = arith.constant 0 : index
    %c0_76 = arith.constant 0 : index
    %164 = vector.load %arg3[%c6_74, %c0_75, %c0_76] : memref<9x8x256xf32, #tpu.memory_space<vmem>>, vector<1x8x256xf32>
    %165 = vector.shape_cast %164 : vector<1x8x256xf32> to vector<8x256xf32>
    %166 = arith.mulf %163, %165 : vector<8x256xf32>
    %167 = arith.addf %162, %166 : vector<8x256xf32>
    %c240_i32_77 = arith.constant 240 : i32
    %168 = tpu.dynamic_rotate %132 by %c240_i32_77 dim 1 : vector<8x256xf32>, i32 -> vector<8x256xf32>
    %c7_78 = arith.constant 7 : index
    %c0_79 = arith.constant 0 : index
    %c0_80 = arith.constant 0 : index
    %169 = vector.load %arg3[%c7_78, %c0_79, %c0_80] : memref<9x8x256xf32, #tpu.memory_space<vmem>>, vector<1x8x256xf32>
    %170 = vector.shape_cast %169 : vector<1x8x256xf32> to vector<8x256xf32>
    %171 = arith.mulf %168, %170 : vector<8x256xf32>
    %172 = arith.addf %167, %171 : vector<8x256xf32>
    %c239_i32_81 = arith.constant 239 : i32
    %173 = tpu.dynamic_rotate %132 by %c239_i32_81 dim 1 : vector<8x256xf32>, i32 -> vector<8x256xf32>
    %c8_82 = arith.constant 8 : index
    %c0_83 = arith.constant 0 : index
    %c0_84 = arith.constant 0 : index
    %174 = vector.load %arg3[%c8_82, %c0_83, %c0_84] : memref<9x8x256xf32, #tpu.memory_space<vmem>>, vector<1x8x256xf32>
    %175 = vector.shape_cast %174 : vector<1x8x256xf32> to vector<8x256xf32>
    %176 = arith.mulf %173, %175 : vector<8x256xf32>
    %177 = arith.addf %172, %176 : vector<8x256xf32>
    %178 = vector.broadcast %7 : vector<8x1xf32> to vector<8x256xf32>
    %179 = arith.addf %177, %178 : vector<8x256xf32>
    %cst_85 = arith.constant 0.000000e+00 : f32
    %180 = vector.broadcast %cst_85 : f32 to vector<8x256xf32>
    %181 = arith.cmpf ogt, %179, %180 : vector<8x256xf32>
    %182 = vector.broadcast %9 : vector<8x1xf32> to vector<8x256xf32>
    %183 = arith.mulf %182, %179 : vector<8x256xf32>
    %184 = arith.select %181, %179, %183 : vector<8x256xi1>, vector<8x256xf32>
    %cst_86 = arith.constant dense<0.000000e+00> : vector<8x256xf32>
    %185 = tpu.matmul %1, %184, %cst_86 {dimension_numbers = #tpu.dot_dimension_numbers<[1], [0], [0], [1], [0, 0, 1, 1], [], []>} : vector<8x8xf32>, vector<8x256xf32>, vector<8x256xf32> -> vector<8x256xf32>
    %186 = vector.broadcast %10 : vector<8x1xf32> to vector<8x256xf32>
    %187 = arith.addf %185, %186 : vector<8x256xf32>
    %c1_87 = arith.constant 1 : index
    %c0_88 = arith.constant 0 : index
    %c0_89 = arith.constant 0 : index
    %188 = vector.load %arg7[%c1_87, %c0_88, %c0_89] : memref<2x8x256xf32, #tpu.memory_space<vmem>>, vector<1x8x256xf32>
    %189 = vector.shape_cast %188 : vector<1x8x256xf32> to vector<8x256xf32>
    %190 = vector.shape_cast %187 : vector<8x256xf32> to vector<1x8x256xf32>
    tpu.vector_store %arg7[%c1_87, %c0_88, %c0_89], %190 {strides = array<i32>} : memref<2x8x256xf32, #tpu.memory_space<vmem>>, vector<1x8x256xf32>,
    return
  }
  func.func @transform_0(%arg0: i32) -> (i32, i32, i32) {
    %c0_i32 = arith.constant 0 : i32
    %c0_i32_0 = arith.constant 0 : i32
    %c0_i32_1 = arith.constant 0 : i32
    return %arg0, %c0_i32, %c0_i32_0 : i32, i32, i32
  }
  func.func @transform_1(%arg0: i32) -> (i32, i32) {
    %c0_i32 = arith.constant 0 : i32
    %c0_i32_0 = arith.constant 0 : i32
    %c0_i32_1 = arith.constant 0 : i32
    return %c0_i32, %c0_i32_0 : i32, i32
  }
  func.func @transform_2(%arg0: i32) -> (i32, i32, i32) {
    %c0_i32 = arith.constant 0 : i32
    %c0_i32_0 = arith.constant 0 : i32
    %c0_i32_1 = arith.constant 0 : i32
    %c0_i32_2 = arith.constant 0 : i32
    return %c0_i32, %c0_i32_0, %c0_i32_1 : i32, i32, i32
  }
  func.func @transform_3(%arg0: i32) -> (i32, i32) {
    %c0_i32 = arith.constant 0 : i32
    %c0_i32_0 = arith.constant 0 : i32
    %c0_i32_1 = arith.constant 0 : i32
    return %c0_i32, %c0_i32_0 : i32, i32
  }
  func.func @transform_4(%arg0: i32) -> (i32, i32, i32) {
    %c0_i32 = arith.constant 0 : i32
    %c0_i32_0 = arith.constant 0 : i32
    %c0_i32_1 = arith.constant 0 : i32
    %c0_i32_2 = arith.constant 0 : i32
    return %c0_i32, %c0_i32_0, %c0_i32_1 : i32, i32, i32
  }
  func.func @transform_5(%arg0: i32) -> (i32, i32) {
    %c0_i32 = arith.constant 0 : i32
    %c0_i32_0 = arith.constant 0 : i32
    %c0_i32_1 = arith.constant 0 : i32
    return %c0_i32, %c0_i32_0 : i32, i32
  }
  func.func @transform_6(%arg0: i32) -> (i32, i32, i32) {
    %c0_i32 = arith.constant 0 : i32
    %c0_i32_0 = arith.constant 0 : i32
    %c0_i32_1 = arith.constant 0 : i32
    return %arg0, %c0_i32, %c0_i32_0 : i32, i32, i32
  }
}

</mosaic_0001>

<llo_original>
// kernel: tpu_custom_call.1
$region0: #{tpu_custom_call.1}
  #allocation0 [shape = 'u32[]', space=smem, size = 0x4, offset = 0x4, fixed_abs, tag = 'smem constant byte address 0x4 - core index']
  #allocation1 [shape = 'u32[72,128]{1,0:T(1,128)}', space=vmem, size = 0x9000, scoped, tag = 'internal scratch']
  %s0 = inlined_call_operand.vmem [shape: f32[2,4,256], index: 0, kind: input, shape index: {}]
  %s1 = inlined_call_operand.vmem [shape: f32[8,4], index: 1, kind: input, shape index: {}]
  %s2 = inlined_call_operand.hbm [shape: f32[9,8,256], index: 2, kind: input, shape index: {}]
  %s3 = inlined_call_operand.vmem [shape: f32[8,8], index: 3, kind: input, shape index: {}]
  %s4 = inlined_call_operand.vmem [shape: f32[4,8,1], index: 4, kind: input, shape index: {}]
  %s5 = inlined_call_operand.vmem [shape: f32[8,1], index: 5, kind: input, shape index: {}]
  %s6 = inlined_call_operand.hbm [shape: f32[2,8,256], index: 6, kind: output, shape index: {}]
  %s7 = sld [smem:[#allocation0]]
  $region38: #{tpu_custom_call.1} parent=0
    _
  %s9 = ssub.s32 1, %s7
  %s10 = scalar_select 0, %s9, %s7
  $region1: #{tpu_custom_call.1} parent=0
    #allocation2 [shape = 'u8[73728]{0}', space=vmem, size = 0x12000, scoped, tag = 'input window, operand 2, single buffered']
    #allocation3 [shape = 's32[1]{0}', space=sflag, size = 0x4, scoped, tag = 'scoped memory for tpu_custom_call.1']
    #allocation4 [shape = 's32[1]{0}', space=sflag, size = 0x4, scoped, tag = 'scoped memory for tpu_custom_call.1']
    #allocation5 [shape = 'u8[16384]{0}', space=vmem, size = 0x4000, scoped, tag = 'output window, operand 0, single buffered']
    %11 = vsyncpa [#allocation3], 0
    %12 = vsyncpa [#allocation4], 0
    // Predicated region
    $region2: #{tpu_custom_call.1} parent=1 // pred_check
      _
    $region3: #{tpu_custom_call.1} parent=1 // pred_check_branch
      %14 = sbr.rel (0) target = $region5
    $region4: #{tpu_custom_call.1} parent=1 // pred_region
      _
    $region5: #{tpu_custom_call.1} parent=1 // pred_fallthru
      _
    // Predicated region
    $region6: #{tpu_custom_call.1} parent=1 // pred_check
      _
    $region7: #{tpu_custom_call.1} parent=1 // pred_check_branch
      %16 = sbr.rel (0) target = $region9
    $region8: #{tpu_custom_call.1} parent=1 // pred_region
      _
    $region9: #{tpu_custom_call.1} parent=1 // pred_fallthru
      _
    // Predicated region
    $region10: #{tpu_custom_call.1} parent=1 // pred_check
      _
    $region11: #{tpu_custom_call.1} parent=1 // pred_check_branch
      %18 = sbr.rel (0) target = $region13
    $region12: #{tpu_custom_call.1} parent=1 // pred_region
      %20 = vsyncadd [#allocation3], 0
      %s21 = sshll.u32 %s2, 4
      %s22 = int_to_ptr.hbm [resolvable:$true] %s21
      %s23 = sshll.u32 [#allocation2], 4
      %s24 = int_to_ptr.vmem [resolvable:$true] %s23
      %29 = dma.hbm_to_vmem [thread:$0]  %s22, 2304, %s24, [#allocation3], 256, 256, 16
    $region13: #{tpu_custom_call.1} parent=1 // pred_fallthru
      _
    // Predicated region
    $region14: #{tpu_custom_call.1} parent=1 // pred_check
      _
    $region15: #{tpu_custom_call.1} parent=1 // pred_check_branch
      %31 = sbr.rel (0) target = $region17
    $region16: #{tpu_custom_call.1} parent=1 // pred_region
      _
    $region17: #{tpu_custom_call.1} parent=1 // pred_fallthru
      _
    // Predicated region
    $region18: #{tpu_custom_call.1} parent=1 // pred_check
      _
    $region19: #{tpu_custom_call.1} parent=1 // pred_check_branch
      %33 = sbr.rel (0) target = $region21
    $region20: #{tpu_custom_call.1} parent=1 // pred_region
      _
    $region21: #{tpu_custom_call.1} parent=1 // pred_fallthru
      _
    // Predicated region
    $region22: #{tpu_custom_call.1} parent=1 // pred_check
      _
    $region23: #{tpu_custom_call.1} parent=1 // pred_check_branch
      %35 = sbr.rel (0) target = $region25
    $region24: #{tpu_custom_call.1} parent=1 // pred_region
      _
    $region25: #{tpu_custom_call.1} parent=1 // pred_fallthru
      _
    // Predicated region
    $region26: #{tpu_custom_call.1} parent=1 // pred_check
      _
    $region27: #{tpu_custom_call.1} parent=1 // pred_check_branch
      %37 = sbr.rel (0) target = $region29
    $region28: #{tpu_custom_call.1} parent=1 // pred_region
      %39 = dma.done [#allocation3], 2304
    $region29: #{tpu_custom_call.1} parent=1 // pred_fallthru
      _
    %v40 = vld [vmem:[%s1] sm:$0xff]
    %v41 = vld [vmem:[%s3] sm:$0xff]
    %v42 = vld [vmem:[%s4] sm:$0xff]
    %s43 = scalar_lea.vmem %s4, 8
    %v44 = vld [vmem:[%s43] sm:$0xff]
    %s45 = scalar_lea.vmem %s4, 16
    %v46 = vld [vmem:[%s45] sm:$0xff]
    %s47 = scalar_lea.vmem %s4, 24
    %v48 = vld [vmem:[%s47] sm:$0xff]
    %v49 = vld [vmem:[%s5] sm:$0xff]
    %v50 = vld [vmem:[%s0] sm:$0xff]
    %52 = vset.pattern.permute.xlu0 0
    %53 = vperm.xlu0 %52, %v40
    %v54 = vpop.permute.xlu0 %53
    %v57 = vperm.slane %v50, 0
    %v58 = vperm.slane %v50, 4
    %v61 = vperm.slane %v57, 0
    %v62 = vperm.slane %v58, 0
    %v63 = vmul.f32 %v54, %v61
    %v64 = vmul.f32 %v54, %v62
    %65 = vset.pattern.permute.xlu0 1
    %66 = vperm.xlu0 %65, %v40
    %v67 = vpop.permute.xlu0 %66
    %v69 = vperm.slane %v50, 1
    %v70 = vperm.slane %v50, 5
    %v73 = vperm.slane %v69, 1
    %v74 = vperm.slane %v70, 1
    %v75 = vmul.f32 %v67, %v73
    %v76 = vmul.f32 %v67, %v74
    %v77 = vadd.f32 %v63, %v75
    %v78 = vadd.f32 %v64, %v76
    %79 = vset.pattern.permute.xlu0 2
    %80 = vperm.xlu0 %79, %v40
    %v81 = vpop.permute.xlu0 %80
    %v83 = vperm.slane %v50, 2
    %v84 = vperm.slane %v50, 6
    %v87 = vperm.slane %v83, 2
    %v88 = vperm.slane %v84, 2
    %v89 = vmul.f32 %v81, %v87
    %v90 = vmul.f32 %v81, %v88
    %v91 = vadd.f32 %v77, %v89
    %v92 = vadd.f32 %v78, %v90
    %93 = vset.pattern.permute.xlu0 3
    %94 = vperm.xlu0 %93, %v40
    %v95 = vpop.permute.xlu0 %94
    %v97 = vperm.slane %v50, 3
    %v98 = vperm.slane %v50, 7
    %v101 = vperm.slane %v97, 3
    %v102 = vperm.slane %v98, 3
    %v103 = vmul.f32 %v95, %v101
    %v104 = vmul.f32 %v95, %v102
    %v105 = vadd.f32 %v91, %v103
    %v106 = vadd.f32 %v92, %v104
    %108 = vset.pattern.permute.xlu0 0
    %109 = vperm.xlu0 %108, %v42
    %v110 = vpop.permute.xlu0 %109
    %v112 = vadd.f32 %v105, %v110
    %v113 = vadd.f32 %v106, %v110
    %vm114 = vcmp.gt.f32.partialorder %v112, 0.0
    %vm115 = vcmp.gt.f32.partialorder %v113, 0.0
    %117 = vset.pattern.permute.xlu0 0
    %118 = vperm.xlu0 %117, %v44
    %v119 = vpop.permute.xlu0 %118
    %v121 = vmul.f32 %v119, %v112
    %v122 = vmul.f32 %v119, %v113
    %v123 = vsel %vm114, %v112, %v121
    %v124 = vsel %vm115, %v113, %v122
    %125 = vrot.lane.b32.xlu0 %v123, 17
    %v126 = vpop.permute.xlu0 %125
    %127 = vrot.lane.b32.xlu0 %v124, 17
    %v128 = vpop.permute.xlu0 %127
    %v129 = vlaneseq
    %v130 = vand.u32 %v129, 127
    %vm131 = vcmp.lt.s32.totalorder %v130, 17
    %v132 = vsel %vm131, %v126, %v128
    %v133 = vsel %vm131, %v128, %v126
    %v134 = vld [vmem:[#allocation2] sm:$0xff]
    %v135 = vld [vmem:[#allocation2 + $0x8] sm:$0xff]
    %v136 = vmul.f32 %v133, %v134
    %v137 = vmul.f32 %v132, %v135
    %v138 = vadd.f32 %v136, 0.0
    %v139 = vadd.f32 %v137, 0.0
    %140 = vrot.lane.b32.xlu0 %v123, 16
    %v141 = vpop.permute.xlu0 %140
    %142 = vrot.lane.b32.xlu0 %v124, 16
    %v143 = vpop.permute.xlu0 %142
    %vm144 = vcmp.lt.s32.totalorder %v130, 16
    %v145 = vsel %vm144, %v141, %v143
    %v146 = vsel %vm144, %v143, %v141
    %s147 = scalar_lea.vmem [#allocation2], 16
    %v148 = vld [vmem:[%s147] sm:$0xff]
    %v149 = vld [vmem:[%s147 + $0x8] sm:$0xff]
    %v150 = vmul.f32 %v146, %v148
    %v151 = vmul.f32 %v145, %v149
    %v152 = vadd.f32 %v138, %v150
    %v153 = vadd.f32 %v139, %v151
    %154 = vrot.lane.b32.xlu0 %v123, 15
    %v155 = vpop.permute.xlu0 %154
    %156 = vrot.lane.b32.xlu0 %v124, 15
    %v157 = vpop.permute.xlu0 %156
    %vm158 = vcmp.lt.s32.totalorder %v130, 15
    %v159 = vsel %vm158, %v155, %v157
    %v160 = vsel %vm158, %v157, %v155
    %s161 = scalar_lea.vmem [#allocation2], 32
    %v162 = vld [vmem:[%s161] sm:$0xff]
    %v163 = vld [vmem:[%s161 + $0x8] sm:$0xff]
    %v164 = vmul.f32 %v160, %v162
    %v165 = vmul.f32 %v159, %v163
    %v166 = vadd.f32 %v152, %v164
    %v167 = vadd.f32 %v153, %v165
    %168 = vrot.lane.b32.xlu0 %v123, 1
    %v169 = vpop.permute.xlu0 %168
    %170 = vrot.lane.b32.xlu0 %v124, 1
    %v171 = vpop.permute.xlu0 %170
    %vm172 = vcmp.lt.s32.totalorder %v130, 1
    %v173 = vsel %vm172, %v169, %v171
    %v174 = vsel %vm172, %v171, %v169
    %s175 = scalar_lea.vmem [#allocation2], 48
    %v176 = vld [vmem:[%s175] sm:$0xff]
    %v177 = vld [vmem:[%s175 + $0x8] sm:$0xff]
    %v178 = vmul.f32 %v174, %v176
    %v179 = vmul.f32 %v173, %v177
    %v180 = vadd.f32 %v166, %v178
    %v181 = vadd.f32 %v167, %v179
    %s182 = scalar_lea.vmem [#allocation2], 64
    %v183 = vld [vmem:[%s182] sm:$0xff]
    %v184 = vld [vmem:[%s182 + $0x8] sm:$0xff]
    %v185 = vmul.f32 %v123, %v183
    %v186 = vmul.f32 %v124, %v184
    %v187 = vadd.f32 %v180, %v185
    %v188 = vadd.f32 %v181, %v186
    %189 = vrot.lane.b32.xlu0 %v123, 127
    %v190 = vpop.permute.xlu0 %189
    %191 = vrot.lane.b32.xlu0 %v124, 127
    %v192 = vpop.permute.xlu0 %191
    %vm193 = vcmp.lt.s32.totalorder %v130, 127
    %v194 = vsel %vm193, %v190, %v192
    %v195 = vsel %vm193, %v192, %v190
    %s196 = scalar_lea.vmem [#allocation2], 80
    %v197 = vld [vmem:[%s196] sm:$0xff]
    %v198 = vld [vmem:[%s196 + $0x8] sm:$0xff]
    %v199 = vmul.f32 %v194, %v197
    %v200 = vmul.f32 %v195, %v198
    %v201 = vadd.f32 %v187, %v199
    %v202 = vadd.f32 %v188, %v200
    %203 = vrot.lane.b32.xlu0 %v123, 113
    %v204 = vpop.permute.xlu0 %203
    %205 = vrot.lane.b32.xlu0 %v124, 113
    %v206 = vpop.permute.xlu0 %205
    %vm207 = vcmp.lt.s32.totalorder %v130, 113
    %v208 = vsel %vm207, %v204, %v206
    %v209 = vsel %vm207, %v206, %v204
    %s210 = scalar_lea.vmem [#allocation2], 96
    %v211 = vld [vmem:[%s210] sm:$0xff]
    %v212 = vld [vmem:[%s210 + $0x8] sm:$0xff]
    %v213 = vmul.f32 %v208, %v211
    %v214 = vmul.f32 %v209, %v212
    %v215 = vadd.f32 %v201, %v213
    %v216 = vadd.f32 %v202, %v214
    %217 = vrot.lane.b32.xlu0 %v123, 112
    %v218 = vpop.permute.xlu0 %217
    %219 = vrot.lane.b32.xlu0 %v124, 112
    %v220 = vpop.permute.xlu0 %219
    %vm221 = vcmp.lt.s32.totalorder %v130, 112
    %v222 = vsel %vm221, %v218, %v220
    %v223 = vsel %vm221, %v220, %v218
    %s224 = scalar_lea.vmem [#allocation2], 112
    %v225 = vld [vmem:[%s224] sm:$0xff]
    %v226 = vld [vmem:[%s224 + $0x8] sm:$0xff]
    %v227 = vmul.f32 %v222, %v225
    %v228 = vmul.f32 %v223, %v226
    %v229 = vadd.f32 %v215, %v227
    %v230 = vadd.f32 %v216, %v228
    %231 = vrot.lane.b32.xlu0 %v123, 111
    %v232 = vpop.permute.xlu0 %231
    %233 = vrot.lane.b32.xlu0 %v124, 111
    %v234 = vpop.permute.xlu0 %233
    %vm235 = vcmp.lt.s32.totalorder %v130, 111
    %v236 = vsel %vm235, %v232, %v234
    %v237 = vsel %vm235, %v234, %v232
    %s238 = scalar_lea.vmem [#allocation2], 128
    %v239 = vld [vmem:[%s238] sm:$0xff]
    %v240 = vld [vmem:[%s238 + $0x8] sm:$0xff]
    %v241 = vmul.f32 %v236, %v239
    %v242 = vmul.f32 %v237, %v240
    %v243 = vadd.f32 %v229, %v241
    %v244 = vadd.f32 %v230, %v242
    %246 = vset.pattern.permute.xlu0 0
    %247 = vperm.xlu0 %246, %v46
    %v248 = vpop.permute.xlu0 %247
    %v250 = vadd.f32 %v243, %v248
    %v251 = vadd.f32 %v244, %v248
    %vm252 = vcmp.gt.f32.partialorder %v250, 0.0
    %vm253 = vcmp.gt.f32.partialorder %v251, 0.0
    %255 = vset.pattern.permute.xlu0 0
    %256 = vperm.xlu0 %255, %v48
    %v257 = vpop.permute.xlu0 %256
    %v259 = vmul.f32 %v257, %v250
    %v260 = vmul.f32 %v257, %v251
    %v261 = vsel %vm252, %v250, %v259
    %v262 = vsel %vm253, %v251, %v260
    %264 = vset.pattern.permute.xlu0 0
    %265 = vperm.xlu0 %264, %v49
    %v266 = vpop.permute.xlu0 %265
    %vm268 = vcmask 64512
    %v270 = vsel %vm268, %v41, 0
    %272 = vmatpush.msra.mxu0 0.0
    %273 = vmatpush.msra.mxu0 0.0
    %274 = vmatpush.msra.mxu0 0.0
    %275 = vmatpush.msra.mxu0 0.0
    %276 = vmatpush.msra.mxu0 0.0
    %277 = vmatpush.msra.mxu0 0.0
    %278 = vmatpush.msra.mxu0 0.0
    %279 = vmatpush.msra.mxu0 0.0
    %280 = vmatpush.msra.mxu0 0.0
    %281 = vmatpush.msra.mxu0 0.0
    %282 = vmatpush.msra.mxu0 0.0
    %283 = vmatpush.msra.mxu0 0.0
    %284 = vmatpush.msra.mxu0 0.0
    %285 = vmatpush.msra.mxu0 0.0
    %286 = vmatpush.msra.mxu0 0.0
    %287 = vmatpush.msra.mxu0 %v261
    %288 = vmatmul.f32.gmra.mxu0 %v270
    %v289 = vpop.f32.mrf.mxu0
    %v290 = vadd.f32 %v266, %v289
    %291 = vdwg.mxu0
    %292 = vmatpush.msra.mxu0 0.0
    %293 = vmatpush.msra.mxu0 0.0
    %294 = vmatpush.msra.mxu0 0.0
    %295 = vmatpush.msra.mxu0 0.0
    %296 = vmatpush.msra.mxu0 0.0
    %297 = vmatpush.msra.mxu0 0.0
    %298 = vmatpush.msra.mxu0 0.0
    %299 = vmatpush.msra.mxu0 0.0
    %300 = vmatpush.msra.mxu0 0.0
    %301 = vmatpush.msra.mxu0 0.0
    %302 = vmatpush.msra.mxu0 0.0
    %303 = vmatpush.msra.mxu0 0.0
    %304 = vmatpush.msra.mxu0 0.0
    %305 = vmatpush.msra.mxu0 0.0
    %306 = vmatpush.msra.mxu0 0.0
    %307 = vmatpush.msra.mxu0 %v262
    %308 = vmatmul.f32.gmra.mxu0 %v270
    %v309 = vpop.f32.mrf.mxu0
    %v310 = vadd.f32 %v266, %v309
    %311 = vdwg.mxu0
    %312 = vst [vmem:[#allocation5] sm:$0xff] %v290
    %313 = vst [vmem:[#allocation5 + $0x8] sm:$0xff] %v310
    %s314 = scalar_lea.vmem %s0, 8
    %v315 = vld [vmem:[%s314] sm:$0xff]
    %v317 = vperm.slane %v315, 0
    %v318 = vperm.slane %v315, 4
    %v321 = vperm.slane %v317, 0
    %v322 = vperm.slane %v318, 0
    %v323 = vmul.f32 %v54, %v321
    %v324 = vmul.f32 %v54, %v322
    %v325 = vperm.slane %v315, 1
    %v326 = vperm.slane %v315, 5
    %v329 = vperm.slane %v325, 1
    %v330 = vperm.slane %v326, 1
    %v331 = vmul.f32 %v67, %v329
    %v332 = vmul.f32 %v67, %v330
    %v333 = vadd.f32 %v323, %v331
    %v334 = vadd.f32 %v324, %v332
    %v335 = vperm.slane %v315, 2
    %v336 = vperm.slane %v315, 6
    %v339 = vperm.slane %v335, 2
    %v340 = vperm.slane %v336, 2
    %v341 = vmul.f32 %v81, %v339
    %v342 = vmul.f32 %v81, %v340
    %v343 = vadd.f32 %v333, %v341
    %v344 = vadd.f32 %v334, %v342
    %v345 = vperm.slane %v315, 3
    %v346 = vperm.slane %v315, 7
    %v349 = vperm.slane %v345, 3
    %v350 = vperm.slane %v346, 3
    %v351 = vmul.f32 %v95, %v349
    %v352 = vmul.f32 %v95, %v350
    %v353 = vadd.f32 %v343, %v351
    %v354 = vadd.f32 %v344, %v352
    %v355 = vadd.f32 %v353, %v110
    %v356 = vadd.f32 %v354, %v110
    %vm357 = vcmp.gt.f32.partialorder %v355, 0.0
    %vm358 = vcmp.gt.f32.partialorder %v356, 0.0
    %v359 = vmul.f32 %v119, %v355
    %v360 = vmul.f32 %v119, %v356
    %v361 = vsel %vm357, %v355, %v359
    %v362 = vsel %vm358, %v356, %v360
    %363 = vrot.lane.b32.xlu0 %v361, 17
    %v364 = vpop.permute.xlu0 %363
    %365 = vrot.lane.b32.xlu0 %v362, 17
    %v366 = vpop.permute.xlu0 %365
    %v367 = vsel %vm131, %v364, %v366
    %v368 = vsel %vm131, %v366, %v364
    %v369 = vld [vmem:[#allocation2] sm:$0xff]
    %v370 = vld [vmem:[#allocation2 + $0x8] sm:$0xff]
    %v371 = vmul.f32 %v368, %v369
    %v372 = vmul.f32 %v367, %v370
    %v373 = vadd.f32 %v371, 0.0
    %v374 = vadd.f32 %v372, 0.0
    %375 = vrot.lane.b32.xlu0 %v361, 16
    %v376 = vpop.permute.xlu0 %375
    %377 = vrot.lane.b32.xlu0 %v362, 16
    %v378 = vpop.permute.xlu0 %377
    %v379 = vsel %vm144, %v376, %v378
    %v380 = vsel %vm144, %v378, %v376
    %v381 = vld [vmem:[%s147] sm:$0xff]
    %v382 = vld [vmem:[%s147 + $0x8] sm:$0xff]
    %v383 = vmul.f32 %v380, %v381
    %v384 = vmul.f32 %v379, %v382
    %v385 = vadd.f32 %v373, %v383
    %v386 = vadd.f32 %v374, %v384
    %387 = vrot.lane.b32.xlu0 %v361, 15
    %v388 = vpop.permute.xlu0 %387
    %389 = vrot.lane.b32.xlu0 %v362, 15
    %v390 = vpop.permute.xlu0 %389
    %v391 = vsel %vm158, %v388, %v390
    %v392 = vsel %vm158, %v390, %v388
    %v393 = vld [vmem:[%s161] sm:$0xff]
    %v394 = vld [vmem:[%s161 + $0x8] sm:$0xff]
    %v395 = vmul.f32 %v392, %v393
    %v396 = vmul.f32 %v391, %v394
    %v397 = vadd.f32 %v385, %v395
    %v398 = vadd.f32 %v386, %v396
    %399 = vrot.lane.b32.xlu0 %v361, 1
    %v400 = vpop.permute.xlu0 %399
    %401 = vrot.lane.b32.xlu0 %v362, 1
    %v402 = vpop.permute.xlu0 %401
    %v403 = vsel %vm172, %v400, %v402
    %v404 = vsel %vm172, %v402, %v400
    %v405 = vld [vmem:[%s175] sm:$0xff]
    %v406 = vld [vmem:[%s175 + $0x8] sm:$0xff]
    %v407 = vmul.f32 %v404, %v405
    %v408 = vmul.f32 %v403, %v406
    %v409 = vadd.f32 %v397, %v407
    %v410 = vadd.f32 %v398, %v408
    %v411 = vld [vmem:[%s182] sm:$0xff]
    %v412 = vld [vmem:[%s182 + $0x8] sm:$0xff]
    %v413 = vmul.f32 %v361, %v411
    %v414 = vmul.f32 %v362, %v412
    %v415 = vadd.f32 %v409, %v413
    %v416 = vadd.f32 %v410, %v414
    %417 = vrot.lane.b32.xlu0 %v361, 127
    %v418 = vpop.permute.xlu0 %417
    %419 = vrot.lane.b32.xlu0 %v362, 127
    %v420 = vpop.permute.xlu0 %419
    %v421 = vsel %vm193, %v418, %v420
    %v422 = vsel %vm193, %v420, %v418
    %v423 = vld [vmem:[%s196] sm:$0xff]
    %v424 = vld [vmem:[%s196 + $0x8] sm:$0xff]
    %v425 = vmul.f32 %v421, %v423
    %v426 = vmul.f32 %v422, %v424
    %v427 = vadd.f32 %v415, %v425
    %v428 = vadd.f32 %v416, %v426
    %429 = vrot.lane.b32.xlu0 %v361, 113
    %v430 = vpop.permute.xlu0 %429
    %431 = vrot.lane.b32.xlu0 %v362, 113
    %v432 = vpop.permute.xlu0 %431
    %v433 = vsel %vm207, %v430, %v432
    %v434 = vsel %vm207, %v432, %v430
    %v435 = vld [vmem:[%s210] sm:$0xff]
    %v436 = vld [vmem:[%s210 + $0x8] sm:$0xff]
    %v437 = vmul.f32 %v433, %v435
    %v438 = vmul.f32 %v434, %v436
    %v439 = vadd.f32 %v427, %v437
    %v440 = vadd.f32 %v428, %v438
    %441 = vrot.lane.b32.xlu0 %v361, 112
    %v442 = vpop.permute.xlu0 %441
    %443 = vrot.lane.b32.xlu0 %v362, 112
    %v444 = vpop.permute.xlu0 %443
    %v445 = vsel %vm221, %v442, %v444
    %v446 = vsel %vm221, %v444, %v442
    %v447 = vld [vmem:[%s224] sm:$0xff]
    %v448 = vld [vmem:[%s224 + $0x8] sm:$0xff]
    %v449 = vmul.f32 %v445, %v447
    %v450 = vmul.f32 %v446, %v448
    %v451 = vadd.f32 %v439, %v449
    %v452 = vadd.f32 %v440, %v450
    %453 = vrot.lane.b32.xlu0 %v361, 111
    %v454 = vpop.permute.xlu0 %453
    %455 = vrot.lane.b32.xlu0 %v362, 111
    %v456 = vpop.permute.xlu0 %455
    %v457 = vsel %vm235, %v454, %v456
    %v458 = vsel %vm235, %v456, %v454
    %v459 = vld [vmem:[%s238] sm:$0xff]
    %v460 = vld [vmem:[%s238 + $0x8] sm:$0xff]
    %v461 = vmul.f32 %v457, %v459
    %v462 = vmul.f32 %v458, %v460
    %v463 = vadd.f32 %v451, %v461
    %v464 = vadd.f32 %v452, %v462
    %v465 = vadd.f32 %v463, %v248
    %v466 = vadd.f32 %v464, %v248
    %vm467 = vcmp.gt.f32.partialorder %v465, 0.0
    %vm468 = vcmp.gt.f32.partialorder %v466, 0.0
    %v469 = vmul.f32 %v257, %v465
    %v470 = vmul.f32 %v257, %v466
    %v471 = vsel %vm467, %v465, %v469
    %v472 = vsel %vm468, %v466, %v470
    %473 = vmatpush.msra.mxu0 0.0
    %474 = vmatpush.msra.mxu0 0.0
    %475 = vmatpush.msra.mxu0 0.0
    %476 = vmatpush.msra.mxu0 0.0
    %477 = vmatpush.msra.mxu0 0.0
    %478 = vmatpush.msra.mxu0 0.0
    %479 = vmatpush.msra.mxu0 0.0
    %480 = vmatpush.msra.mxu0 0.0
    %481 = vmatpush.msra.mxu0 0.0
    %482 = vmatpush.msra.mxu0 0.0
    %483 = vmatpush.msra.mxu0 0.0
    %484 = vmatpush.msra.mxu0 0.0
    %485 = vmatpush.msra.mxu0 0.0
    %486 = vmatpush.msra.mxu0 0.0
    %487 = vmatpush.msra.mxu0 0.0
    %488 = vmatpush.msra.mxu0 %v471
    %489 = vmatmul.f32.gmra.mxu0 %v270
    %v490 = vpop.f32.mrf.mxu0
    %v491 = vadd.f32 %v266, %v490
    %492 = vdwg.mxu0
    %493 = vmatpush.msra.mxu0 0.0
    %494 = vmatpush.msra.mxu0 0.0
    %495 = vmatpush.msra.mxu0 0.0
    %496 = vmatpush.msra.mxu0 0.0
    %497 = vmatpush.msra.mxu0 0.0
    %498 = vmatpush.msra.mxu0 0.0
    %499 = vmatpush.msra.mxu0 0.0
    %500 = vmatpush.msra.mxu0 0.0
    %501 = vmatpush.msra.mxu0 0.0
    %502 = vmatpush.msra.mxu0 0.0
    %503 = vmatpush.msra.mxu0 0.0
    %504 = vmatpush.msra.mxu0 0.0
    %505 = vmatpush.msra.mxu0 0.0
    %506 = vmatpush.msra.mxu0 0.0
    %507 = vmatpush.msra.mxu0 0.0
    %508 = vmatpush.msra.mxu0 %v472
    %509 = vmatmul.f32.gmra.mxu0 %v270
    %v510 = vpop.f32.mrf.mxu0
    %v511 = vadd.f32 %v266, %v510
    %512 = vdwg.mxu0
    %s513 = scalar_lea.vmem [#allocation5], 16
    %514 = vst [vmem:[%s513] sm:$0xff] %v491
    %515 = vst [vmem:[%s513 + $0x8] sm:$0xff] %v511
    // Predicated region
    $region30: #{tpu_custom_call.1} parent=1 // pred_check
      _
    $region31: #{tpu_custom_call.1} parent=1 // pred_check_branch
      %517 = sbr.rel (0) target = $region33
    $region32: #{tpu_custom_call.1} parent=1 // pred_region
      %519 = vsyncadd [#allocation4], 0
      %s520 = sshll.u32 [#allocation5], 4
      %s521 = int_to_ptr.vmem [resolvable:$true] %s520
      %s522 = sshll.u32 %s6, 4
      %s523 = int_to_ptr.hbm [resolvable:$true] %s522
      %528 = dma.vmem_to_hbm [thread:$0]  %s521, 512, %s523, [#allocation4], 256, 256, 16
    $region33: #{tpu_custom_call.1} parent=1 // pred_fallthru
      _
    // Predicated region
    $region34: #{tpu_custom_call.1} parent=1 // pred_check
      _
    $region35: #{tpu_custom_call.1} parent=1 // pred_check_branch
      %530 = sbr.rel (0) target = $region37
    $region36: #{tpu_custom_call.1} parent=1 // pred_region
      %532 = dma.done [#allocation4], 512
    $region37: #{tpu_custom_call.1} parent=1 // pred_fallthru
      _
    %533 = vsyncpa [#allocation3], 1
    %534 = vsyncpa [#allocation4], 1

</llo_original>
